<compile_context>
chip_gen: v6e
topology: v6e:2x2x1
jax: 0.10.0
libtpu: 0.0.40
codegen_flags: <defaults>
</compile_context>

<pallas_src>
import functools
import math

import jax
import jax.numpy as jnp
from jax import lax
from jax.experimental import pallas as pl
from jax.experimental.pallas import tpu as pltpu

LANE = 128


def _round_up(n, m):
    return ((n + m - 1) // m) * m


def dqn_kernel(action_dim, x_ref, w1_ref, b1_ref, w2_ref, b2_ref, q_ref, act_ref):
    # Q = relu(x @ W1 + b1) @ W2 + b2  with lane-padded weights; compute stays
    # 128-wide in VMEM, only action_dim Q columns + 1 action column leave the chip.
    x = x_ref[...]                                                    # (TB, S)
    h = jnp.dot(x, w1_ref[...], preferred_element_type=jnp.float32)  # (TB, Hp) MXU
    h = jnp.maximum(h + b1_ref[...], 0.0)                            # bias + ReLU (VPU)
    q = jnp.dot(h, w2_ref[...], preferred_element_type=jnp.float32)  # (TB, Ap) MXU
    q = q + b2_ref[...]

    # Narrow Q writeback: only the valid action columns are stored.
    q_ref[...] = q[:, :action_dim]

    # Fused greedy action selection over the valid (unpadded) action lanes.
    tb, ap = q.shape
    col = lax.broadcasted_iota(jnp.int32, (tb, ap), 1)
    q_masked = jnp.where(col < action_dim, q, -jnp.inf)
    max_q = jnp.max(q_masked, axis=-1, keepdims=True)                 # (TB, 1)
    first_hit = jnp.where(q_masked == max_q, col, ap)                 # first index of max
    act_ref[...] = jnp.min(first_hit, axis=-1, keepdims=True).astype(jnp.int32)


def _choose_tb(batch, tb_max):
    bp8 = _round_up(batch, 8)
    if bp8 <= 8:
        # Tiny inference act() path: one grid step with TB=8 is already optimal;
        # further splitting only adds per-step overhead (launch-latency bound).
        return bp8
    # Training / replay path: aim for >= 2 grid steps so the "parallel" batch axis
    # actually uses both v7x TensorCores, capped at tb_max (per-step overhead
    # amortizes by tile >= 512; VMEM is never binding at these sizes).
    half = _round_up((bp8 + 1) // 2, 8)
    return min(tb_max, half)


def dqn_forward(x, w1p, b1p, w2p, b2p, action_dim, *, tb=1024):
    """x: (B, S) f32; padded params: w1p (S, Hp), b1p (1, Hp), w2p (Hp, Ap), b2p (1, Ap).

    Returns (q, actions): q is (B, action_dim) f32, actions is (B,) int32 (greedy).
    """
    B, S = x.shape
    Hp = w1p.shape[1]
    Ap = w2p.shape[1]

    tb = _choose_tb(B, tb)
    Bp = _round_up(B, tb)
    if Bp != B:
        x = jnp.pad(x, ((0, Bp - B), (0, 0)))

    grid = (Bp // tb,)
    kernel = functools.partial(dqn_kernel, action_dim)

    q, act = pl.pallas_call(
        kernel,
        out_shape=(
            jax.ShapeDtypeStruct((Bp, action_dim), jnp.float32),
            jax.ShapeDtypeStruct((Bp, 1), jnp.int32),
        ),
        grid=grid,
        in_specs=[
            pl.BlockSpec((tb, S), lambda i: (i, 0)),   # x: batch-tiled, pipelined
            pl.BlockSpec((S, Hp), lambda i: (0, 0)),   # weights stay VMEM-resident
            pl.BlockSpec((1, Hp), lambda i: (0, 0)),
            pl.BlockSpec((Hp, Ap), lambda i: (0, 0)),
            pl.BlockSpec((1, Ap), lambda i: (0, 0)),
        ],
        out_specs=(
            pl.BlockSpec((tb, action_dim), lambda i: (i, 0)),  # narrow Q writeback
            pl.BlockSpec((tb, 1), lambda i: (i, 0)),           # single action column
        ),
        compiler_params=pltpu.CompilerParams(
            dimension_semantics=("parallel",),          # shards batch across v7x's 2 TCs
        ),
    )(x, w1p, b1p, w2p, b2p)

    if Bp != B:
        q = q[:B]
        act = act[:B]
    return q, act[:, 0]


def init_dqn_params(key, state_dim, hidden_layer, action_dim):
    # PyTorch nn.Linear default init: U(-1/sqrt(fan_in), 1/sqrt(fan_in)).
    k1, k2, k3, k4 = jax.random.split(key, 4)
    bound1 = 1.0 / math.sqrt(state_dim)
    bound2 = 1.0 / math.sqrt(hidden_layer)
    w1 = jax.random.uniform(k1, (state_dim, hidden_layer), jnp.float32, -bound1, bound1)
    b1 = jax.random.uniform(k2, (1, hidden_layer), jnp.float32, -bound1, bound1)
    w2 = jax.random.uniform(k3, (hidden_layer, action_dim), jnp.float32, -bound2, bound2)
    b2 = jax.random.uniform(k4, (1, action_dim), jnp.float32, -bound2, bound2)

    # Zero-pad feature dims to the 128-lane width (exact; zeros are inert).
    Hp = _round_up(hidden_layer, LANE)
    Ap = _round_up(action_dim, LANE)
    w1p = jnp.zeros((state_dim, Hp), jnp.float32).at[:, :hidden_layer].set(w1)
    b1p = jnp.zeros((1, Hp), jnp.float32).at[:, :hidden_layer].set(b1)
    w2p = jnp.zeros((Hp, Ap), jnp.float32).at[:hidden_layer, :action_dim].set(w2)
    b2p = jnp.zeros((1, Ap), jnp.float32).at[:, :action_dim].set(b2)
    return (w1, b1, w2, b2), (w1p, b1p, w2p, b2p)


if __name__ == "__main__":
    # Shapes consistent with the navigation DQN: state_dim=4, action_dim=3,
    # hidden_layer=50 (module default).
    state_dim, hidden_layer, action_dim = 4, 50, 3

    key = jax.random.PRNGKey(0)
    kx, kx2, kp = jax.random.split(key, 3)
    (w1, b1, w2, b2), padded = init_dqn_params(kp, state_dim, hidden_layer, action_dim)

    def ref_fwd(xv):
        rq = jnp.maximum(xv @ w1 + b1, 0.0) @ w2 + b2
        return rq, jnp.argmax(rq, axis=-1).astype(jnp.int32)

    # 1) Tiny inference act() path (B=8, single grid step).
    x = jax.random.normal(kx, (8, state_dim), dtype=jnp.float32)
    q, actions = dqn_forward(x, *padded, action_dim)
    q = jax.block_until_ready(q)
    actions = jax.block_until_ready(actions)
    ref_q, ref_act = ref_fwd(x)
    assert q.shape == (8, action_dim)
    assert actions.shape == (8,)
    assert jnp.allclose(q, ref_q, atol=1e-5, rtol=1e-5)
    assert jnp.array_equal(actions, ref_act)

    # 2) Replay-batch path (B=40 -> >=2 grid steps, exercises padding + pipeline).
    x2 = jax.random.normal(kx2, (40, state_dim), dtype=jnp.float32)
    q2, actions2 = dqn_forward(x2, *padded, action_dim)
    q2 = jax.block_until_ready(q2)
    actions2 = jax.block_until_ready(actions2)
    ref_q2, ref_act2 = ref_fwd(x2)
    assert q2.shape == (40, action_dim)
    assert actions2.shape == (40,)
    assert jnp.allclose(q2, ref_q2, atol=1e-5, rtol=1e-5)
    assert jnp.array_equal(actions2, ref_act2)

    print("KERNEL_OK")
</pallas_src>

<mosaic_0001>
module attributes {stable_mosaic.version = 11 : i64} {
  func.func @dqn_kernel(%arg0: i32, %arg1: memref<8x4xf32, #tpu.memory_space<vmem>>, %arg2: memref<4x128xf32, #tpu.memory_space<vmem>>, %arg3: memref<1x128xf32, #tpu.memory_space<vmem>>, %arg4: memref<128x128xf32, #tpu.memory_space<vmem>>, %arg5: memref<1x128xf32, #tpu.memory_space<vmem>>, %arg6: memref<8x3xf32, #tpu.memory_space<vmem>>, %arg7: memref<8x1xi32, #tpu.memory_space<vmem>>) attributes {dimension_semantics = [#tpu.dimension_semantics<parallel>], iteration_bounds = array<i64: 1>, scalar_prefetch = 0 : i64, scratch_operands = 0 : i64, tpu.core_type = #tpu.core_type<tc>, window_params = [{transform_indices = @transform_0, window_bounds = array<i64: 8, 4>}, {pipeline_mode = #tpu.pipeline_mode<synchronous>, transform_indices = @transform_1, window_bounds = array<i64: 4, 128>}, {pipeline_mode = #tpu.pipeline_mode<synchronous>, transform_indices = @transform_2, window_bounds = array<i64: 1, 128>}, {pipeline_mode = #tpu.pipeline_mode<synchronous>, transform_indices = @transform_3, window_bounds = array<i64: 128, 128>}, {pipeline_mode = #tpu.pipeline_mode<synchronous>, transform_indices = @transform_4, window_bounds = array<i64: 1, 128>}, {transform_indices = @transform_5, window_bounds = array<i64: 8, 3>}, {transform_indices = @transform_6, window_bounds = array<i64: 8, 1>}]} {
    %c0 = arith.constant 0 : index
    %c0_0 = arith.constant 0 : index
    %0 = vector.load %arg1[%c0, %c0_0] : memref<8x4xf32, #tpu.memory_space<vmem>>, vector<8x4xf32>
    %c0_1 = arith.constant 0 : index
    %c0_2 = arith.constant 0 : index
    %1 = vector.load %arg2[%c0_1, %c0_2] : memref<4x128xf32, #tpu.memory_space<vmem>>, vector<4x128xf32>
    %cst = arith.constant dense<0.000000e+00> : vector<8x128xf32>
    %2 = tpu.matmul %0, %1, %cst {dimension_numbers = #tpu.dot_dimension_numbers<[1], [0], [0], [1], [0, 0, 1, 1], [], []>} : vector<8x4xf32>, vector<4x128xf32>, vector<8x128xf32> -> vector<8x128xf32>
    %c0_3 = arith.constant 0 : index
    %c0_4 = arith.constant 0 : index
    %3 = vector.load %arg3[%c0_3, %c0_4] : memref<1x128xf32, #tpu.memory_space<vmem>>, vector<1x128xf32>
    %4 = vector.broadcast %3 : vector<1x128xf32> to vector<8x128xf32>
    %5 = arith.addf %2, %4 : vector<8x128xf32>
    %cst_5 = arith.constant 0.000000e+00 : f32
    %6 = vector.broadcast %cst_5 : f32 to vector<8x128xf32>
    %7 = arith.maximumf %5, %6 : vector<8x128xf32>
    %c0_6 = arith.constant 0 : index
    %c0_7 = arith.constant 0 : index
    %8 = vector.load %arg4[%c0_6, %c0_7] : memref<128x128xf32, #tpu.memory_space<vmem>>, vector<128x128xf32>
    %cst_8 = arith.constant dense<0.000000e+00> : vector<8x128xf32>
    %9 = tpu.matmul %7, %8, %cst_8 {dimension_numbers = #tpu.dot_dimension_numbers<[1], [0], [0], [1], [0, 0, 1, 1], [], []>} : vector<8x128xf32>, vector<128x128xf32>, vector<8x128xf32> -> vector<8x128xf32>
    %c0_9 = arith.constant 0 : index
    %c0_10 = arith.constant 0 : index
    %10 = vector.load %arg5[%c0_9, %c0_10] : memref<1x128xf32, #tpu.memory_space<vmem>>, vector<1x128xf32>
    %11 = vector.broadcast %10 : vector<1x128xf32> to vector<8x128xf32>
    %12 = arith.addf %9, %11 : vector<8x128xf32>
    %13 = vector.extract_strided_slice %12 {offsets = [0, 0], sizes = [8, 3], strides = [1, 1]} : vector<8x128xf32> to vector<8x3xf32>
    %c0_11 = arith.constant 0 : index
    %c0_12 = arith.constant 0 : index
    %14 = vector.load %arg6[%c0_11, %c0_12] : memref<8x3xf32, #tpu.memory_space<vmem>>, vector<8x3xf32>
    tpu.vector_store %arg6[%c0_11, %c0_12], %13 {strides = array<i32>} : memref<8x3xf32, #tpu.memory_space<vmem>>, vector<8x3xf32>,
    %15 = tpu.iota {dimensions = array<i32: 1>} : vector<8x128xi32>
    %c3_i32 = arith.constant 3 : i32
    %16 = vector.broadcast %c3_i32 : i32 to vector<8x128xi32>
    %17 = arith.cmpi slt, %15, %16 : vector<8x128xi32>
    %cst_13 = arith.constant 0xFF800000 : f32
    %18 = vector.broadcast %cst_13 : f32 to vector<8x128xf32>
    %19 = arith.select %17, %12, %18 : vector<8x128xi1>, vector<8x128xf32>
    %cst_14 = arith.constant dense<0xFF800000> : vector<8xf32>
    %20 = vector.multi_reduction <maximumf>, %19, %cst_14 [1] : vector<8x128xf32> to vector<8xf32>
    %21 = vector.shape_cast %20 : vector<8xf32> to vector<8x1xf32>
    %22 = vector.broadcast %21 : vector<8x1xf32> to vector<8x128xf32>
    %23 = arith.cmpf oeq, %19, %22 : vector<8x128xf32>
    %c128_i32 = arith.constant 128 : i32
    %24 = vector.broadcast %c128_i32 : i32 to vector<8x128xi32>
    %25 = arith.select %23, %15, %24 : vector<8x128xi1>, vector<8x128xi32>
    %cst_15 = arith.constant dense<2147483647> : vector<8xi32>
    %26 = vector.multi_reduction <minsi>, %25, %cst_15 [1] : vector<8x128xi32> to vector<8xi32>
    %27 = vector.shape_cast %26 : vector<8xi32> to vector<8x1xi32>
    %c0_16 = arith.constant 0 : index
    %c0_17 = arith.constant 0 : index
    %28 = vector.load %arg7[%c0_16, %c0_17] : memref<8x1xi32, #tpu.memory_space<vmem>>, vector<8x1xi32>
    tpu.vector_store %arg7[%c0_16, %c0_17], %27 {strides = array<i32>} : memref<8x1xi32, #tpu.memory_space<vmem>>, vector<8x1xi32>,
    return
  }
  func.func @transform_0(%arg0: i32) -> (i32, i32) {
    %c0_i32 = arith.constant 0 : i32
    %c0_i32_0 = arith.constant 0 : i32
    return %arg0, %c0_i32 : i32, i32
  }
  func.func @transform_1(%arg0: i32) -> (i32, i32) {
    %c0_i32 = arith.constant 0 : i32
    %c0_i32_0 = arith.constant 0 : i32
    %c0_i32_1 = arith.constant 0 : i32
    return %c0_i32, %c0_i32_0 : i32, i32
  }
  func.func @transform_2(%arg0: i32) -> (i32, i32) {
    %c0_i32 = arith.constant 0 : i32
    %c0_i32_0 = arith.constant 0 : i32
    %c0_i32_1 = arith.constant 0 : i32
    return %c0_i32, %c0_i32_0 : i32, i32
  }
  func.func @transform_3(%arg0: i32) -> (i32, i32) {
    %c0_i32 = arith.constant 0 : i32
    %c0_i32_0 = arith.constant 0 : i32
    %c0_i32_1 = arith.constant 0 : i32
    return %c0_i32, %c0_i32_0 : i32, i32
  }
  func.func @transform_4(%arg0: i32) -> (i32, i32) {
    %c0_i32 = arith.constant 0 : i32
    %c0_i32_0 = arith.constant 0 : i32
    %c0_i32_1 = arith.constant 0 : i32
    return %c0_i32, %c0_i32_0 : i32, i32
  }
  func.func @transform_5(%arg0: i32) -> (i32, i32) {
    %c0_i32 = arith.constant 0 : i32
    %c0_i32_0 = arith.constant 0 : i32
    return %arg0, %c0_i32 : i32, i32
  }
  func.func @transform_6(%arg0: i32) -> (i32, i32) {
    %c0_i32 = arith.constant 0 : i32
    %c0_i32_0 = arith.constant 0 : i32
    return %arg0, %c0_i32 : i32, i32
  }
}

</mosaic_0001>

<llo_original>
// kernel: tpu_custom_call.1
$region0: #{tpu_custom_call.1}
  #allocation0 [shape = 'u32[]', space=smem, size = 0x4, offset = 0x4, fixed_abs, tag = 'smem constant byte address 0x4 - core index']
  #allocation1 [shape = 'u32[144,128]{1,0:T(1,128)}', space=vmem, size = 0x12000, scoped, tag = 'internal scratch']
  %s0 = inlined_call_operand.vmem [shape: f32[8,4], index: 0, kind: input, shape index: {}]
  %s1 = inlined_call_operand.vmem [shape: f32[4,128], index: 1, kind: input, shape index: {}]
  %s2 = inlined_call_operand.vmem [shape: f32[1,128], index: 2, kind: input, shape index: {}]
  %s3 = inlined_call_operand.hbm [shape: f32[128,128], index: 3, kind: input, shape index: {}]
  %s4 = inlined_call_operand.vmem [shape: f32[1,128], index: 4, kind: input, shape index: {}]
  %s5 = inlined_call_operand.vmem [shape: f32[8,3], index: 5, kind: output, shape index: {0}]
  %s6 = inlined_call_operand.vmem [shape: s32[8,1], index: 6, kind: output, shape index: {1}]
  %7 = xla_tuple %s5, %s6
  %s8 = sld [smem:[#allocation0]]
  $region42: #{tpu_custom_call.1} parent=0
    _
  %s10 = ssub.s32 1, %s8
  %s11 = scalar_select 0, %s10, %s8
  $region1: #{tpu_custom_call.1} parent=0
    #allocation2 [shape = 'u8[65536]{0}', space=vmem, size = 0x10000, scoped, tag = 'input window, operand 3, single buffered']
    #allocation3 [shape = 's32[1]{0}', space=sflag, size = 0x4, scoped, tag = 'scoped memory for tpu_custom_call.1']
    %12 = vsyncpa [#allocation3], 0
    // Predicated region
    $region2: #{tpu_custom_call.1} parent=1 // pred_check
      _
    $region3: #{tpu_custom_call.1} parent=1 // pred_check_branch
      %14 = sbr.rel (0) target = $region5
    $region4: #{tpu_custom_call.1} parent=1 // pred_region
      _
    $region5: #{tpu_custom_call.1} parent=1 // pred_fallthru
      _
    // Predicated region
    $region6: #{tpu_custom_call.1} parent=1 // pred_check
      _
    $region7: #{tpu_custom_call.1} parent=1 // pred_check_branch
      %16 = sbr.rel (0) target = $region9
    $region8: #{tpu_custom_call.1} parent=1 // pred_region
      _
    $region9: #{tpu_custom_call.1} parent=1 // pred_fallthru
      _
    // Predicated region
    $region10: #{tpu_custom_call.1} parent=1 // pred_check
      _
    $region11: #{tpu_custom_call.1} parent=1 // pred_check_branch
      %18 = sbr.rel (0) target = $region13
    $region12: #{tpu_custom_call.1} parent=1 // pred_region
      _
    $region13: #{tpu_custom_call.1} parent=1 // pred_fallthru
      _
    // Predicated region
    $region14: #{tpu_custom_call.1} parent=1 // pred_check
      _
    $region15: #{tpu_custom_call.1} parent=1 // pred_check_branch
      %20 = sbr.rel (0) target = $region17
    $region16: #{tpu_custom_call.1} parent=1 // pred_region
      %s22 = ssub.s32 2048, 2048
      %23 = vsyncadd [#allocation3], %s22
      %s24 = sshll.u32 [#allocation2], 4
      %s25 = int_to_ptr.vmem [resolvable:$true] %s24
      %30 = dma.hbm_to_vmem [thread:$0]  %s3, 2048, %s25, [#allocation3], 128, 128, 8
    $region17: #{tpu_custom_call.1} parent=1 // pred_fallthru
      _
    // Predicated region
    $region18: #{tpu_custom_call.1} parent=1 // pred_check
      _
    $region19: #{tpu_custom_call.1} parent=1 // pred_check_branch
      %32 = sbr.rel (0) target = $region21
    $region20: #{tpu_custom_call.1} parent=1 // pred_region
      _
    $region21: #{tpu_custom_call.1} parent=1 // pred_fallthru
      _
    // Predicated region
    $region22: #{tpu_custom_call.1} parent=1 // pred_check
      _
    $region23: #{tpu_custom_call.1} parent=1 // pred_check_branch
      %34 = sbr.rel (0) target = $region25
    $region24: #{tpu_custom_call.1} parent=1 // pred_region
      %35 = dma.done [#allocation3], 2048
    $region25: #{tpu_custom_call.1} parent=1 // pred_fallthru
      _
    %v36 = vld [vmem:[%s0] sm:$0xff]
    %v37 = vld [vmem:[%s1] sm:$0xf]
    %v38 = vld [vmem:[%s2] sm:$0x1]
    %v40 = vlaneseq
    %v41 = vshrl.u32 %v40, 7
    %v42 = vsub.s32 0, %v41
    %v43 = vrot.slane %v38, %v42
    %vm45 = vcmask 31744
    %v47 = vsel %vm45, %v36, 0
    %vm49 = vcmask 1043456
    %v51 = vsel %vm49, %v37, 0
    %53 = vmatprep.subr.mxu0 0.0
    %54 = vmatpush1.msra.mxu0 0.0
    %55 = vmatprep.subr.mxu0 0.0
    %56 = vmatpush1.msra.mxu0 0.0
    %57 = vmatprep.subr.mxu0 0.0
    %58 = vmatpush1.msra.mxu0 0.0
    %59 = vmatprep.subr.mxu0 0.0
    %60 = vmatpush1.msra.mxu0 0.0
    %61 = vmatprep.subr.mxu0 0.0
    %62 = vmatpush1.msra.mxu0 0.0
    %63 = vmatprep.subr.mxu0 0.0
    %64 = vmatpush1.msra.mxu0 0.0
    %65 = vmatprep.subr.mxu0 0.0
    %66 = vmatpush1.msra.mxu0 0.0
    %67 = vmatprep.subr.mxu0 0.0
    %68 = vmatpush1.msra.mxu0 0.0
    %69 = vmatprep.subr.mxu0 0.0
    %70 = vmatpush1.msra.mxu0 0.0
    %71 = vmatprep.subr.mxu0 0.0
    %72 = vmatpush1.msra.mxu0 0.0
    %73 = vmatprep.subr.mxu0 0.0
    %74 = vmatpush1.msra.mxu0 0.0
    %75 = vmatprep.subr.mxu0 0.0
    %76 = vmatpush1.msra.mxu0 0.0
    %77 = vmatprep.subr.mxu0 0.0
    %78 = vmatpush1.msra.mxu0 0.0
    %79 = vmatprep.subr.mxu0 0.0
    %80 = vmatpush1.msra.mxu0 0.0
    %81 = vmatprep.subr.mxu0 0.0
    %82 = vmatpush1.msra.mxu0 0.0
    %83 = vmatprep.subr.mxu0 0.0
    %84 = vmatpush1.msra.mxu0 %v51
    %85 = vmatprep.subr.mxu0 0.0
    %86 = vmatpush2.msra.mxu0 0.0
    %87 = vmatprep.subr.mxu0 0.0
    %88 = vmatpush2.msra.mxu0 0.0
    %89 = vmatprep.subr.mxu0 0.0
    %90 = vmatpush2.msra.mxu0 0.0
    %91 = vmatprep.subr.mxu0 0.0
    %92 = vmatpush2.msra.mxu0 0.0
    %93 = vmatprep.subr.mxu0 0.0
    %94 = vmatpush2.msra.mxu0 0.0
    %95 = vmatprep.subr.mxu0 0.0
    %96 = vmatpush2.msra.mxu0 0.0
    %97 = vmatprep.subr.mxu0 0.0
    %98 = vmatpush2.msra.mxu0 0.0
    %99 = vmatprep.subr.mxu0 0.0
    %100 = vmatpush2.msra.mxu0 0.0
    %101 = vmatprep.subr.mxu0 0.0
    %102 = vmatpush2.msra.mxu0 0.0
    %103 = vmatprep.subr.mxu0 0.0
    %104 = vmatpush2.msra.mxu0 0.0
    %105 = vmatprep.subr.mxu0 0.0
    %106 = vmatpush2.msra.mxu0 0.0
    %107 = vmatprep.subr.mxu0 0.0
    %108 = vmatpush2.msra.mxu0 0.0
    %109 = vmatprep.subr.mxu0 0.0
    %110 = vmatpush2.msra.mxu0 0.0
    %111 = vmatprep.subr.mxu0 0.0
    %112 = vmatpush2.msra.mxu0 0.0
    %113 = vmatprep.subr.mxu0 0.0
    %114 = vmatpush2.msra.mxu0 0.0
    %115 = vmatprep.subr.mxu0 0.0
    %116 = vmatpush2.msra.mxu0 0.0
    %117 = vmatprep.mubr.f32.mxu0 0.0
    %118 = vmatmul.mubr.f32.gmra.mxu0 %v47
    %v119 = vpop.f32.mrf.mxu0
    %v120 = vadd.f32 %v43, %v119
    %v121 = vpop.f32.mrf.mxu0
    %122 = vdwg.mxu0
    %v123 = vmax.f32 %v120, 0.0
    %v124 = vld [vmem:[#allocation2] sm:$0xff]
    %v125 = vld [vmem:[#allocation2 + $0x8] sm:$0xff]
    %v126 = vld [vmem:[#allocation2 + $0x10] sm:$0xff]
    %v127 = vld [vmem:[#allocation2 + $0x18] sm:$0xff]
    %v128 = vld [vmem:[#allocation2 + $0x20] sm:$0xff]
    %v129 = vld [vmem:[#allocation2 + $0x28] sm:$0xff]
    %v130 = vld [vmem:[#allocation2 + $0x30] sm:$0xff]
    %v131 = vld [vmem:[#allocation2 + $0x38] sm:$0xff]
    %v132 = vld [vmem:[#allocation2 + $0x40] sm:$0xff]
    %v133 = vld [vmem:[#allocation2 + $0x48] sm:$0xff]
    %v134 = vld [vmem:[#allocation2 + $0x50] sm:$0xff]
    %v135 = vld [vmem:[#allocation2 + $0x58] sm:$0xff]
    %v136 = vld [vmem:[#allocation2 + $0x60] sm:$0xff]
    %v137 = vld [vmem:[#allocation2 + $0x68] sm:$0xff]
    %v138 = vld [vmem:[#allocation2 + $0x70] sm:$0xff]
    %v139 = vld [vmem:[#allocation2 + $0x78] sm:$0xff]
    %v140 = vld [vmem:[%s4] sm:$0x1]
    %v142 = vlaneseq
    %v143 = vshrl.u32 %v142, 7
    %v144 = vsub.s32 0, %v143
    %v145 = vrot.slane %v140, %v144
    %147 = vmatprep.subr.mxu0 0.0
    %148 = vmatpush1.msra.mxu0 %v139
    %149 = vmatprep.subr.mxu0 0.0
    %150 = vmatpush1.msra.mxu0 %v138
    %151 = vmatprep.subr.mxu0 0.0
    %152 = vmatpush1.msra.mxu0 %v137
    %153 = vmatprep.subr.mxu0 0.0
    %154 = vmatpush1.msra.mxu0 %v136
    %155 = vmatprep.subr.mxu0 0.0
    %156 = vmatpush1.msra.mxu0 %v135
    %157 = vmatprep.subr.mxu0 0.0
    %158 = vmatpush1.msra.mxu0 %v134
    %159 = vmatprep.subr.mxu0 0.0
    %160 = vmatpush1.msra.mxu0 %v133
    %161 = vmatprep.subr.mxu0 0.0
    %162 = vmatpush1.msra.mxu0 %v132
    %163 = vmatprep.subr.mxu0 0.0
    %164 = vmatpush1.msra.mxu0 %v131
    %165 = vmatprep.subr.mxu0 0.0
    %166 = vmatpush1.msra.mxu0 %v130
    %167 = vmatprep.subr.mxu0 0.0
    %168 = vmatpush1.msra.mxu0 %v129
    %169 = vmatprep.subr.mxu0 0.0
    %170 = vmatpush1.msra.mxu0 %v128
    %171 = vmatprep.subr.mxu0 0.0
    %172 = vmatpush1.msra.mxu0 %v127
    %173 = vmatprep.subr.mxu0 0.0
    %174 = vmatpush1.msra.mxu0 %v126
    %175 = vmatprep.subr.mxu0 0.0
    %176 = vmatpush1.msra.mxu0 %v125
    %177 = vmatprep.subr.mxu0 0.0
    %178 = vmatpush1.msra.mxu0 %v124
    %179 = vmatprep.subr.mxu0 0.0
    %180 = vmatpush2.msra.mxu0 0.0
    %181 = vmatprep.subr.mxu0 0.0
    %182 = vmatpush2.msra.mxu0 0.0
    %183 = vmatprep.subr.mxu0 0.0
    %184 = vmatpush2.msra.mxu0 0.0
    %185 = vmatprep.subr.mxu0 0.0
    %186 = vmatpush2.msra.mxu0 0.0
    %187 = vmatprep.subr.mxu0 0.0
    %188 = vmatpush2.msra.mxu0 0.0
    %189 = vmatprep.subr.mxu0 0.0
    %190 = vmatpush2.msra.mxu0 0.0
    %191 = vmatprep.subr.mxu0 0.0
    %192 = vmatpush2.msra.mxu0 0.0
    %193 = vmatprep.subr.mxu0 0.0
    %194 = vmatpush2.msra.mxu0 0.0
    %195 = vmatprep.subr.mxu0 0.0
    %196 = vmatpush2.msra.mxu0 0.0
    %197 = vmatprep.subr.mxu0 0.0
    %198 = vmatpush2.msra.mxu0 0.0
    %199 = vmatprep.subr.mxu0 0.0
    %200 = vmatpush2.msra.mxu0 0.0
    %201 = vmatprep.subr.mxu0 0.0
    %202 = vmatpush2.msra.mxu0 0.0
    %203 = vmatprep.subr.mxu0 0.0
    %204 = vmatpush2.msra.mxu0 0.0
    %205 = vmatprep.subr.mxu0 0.0
    %206 = vmatpush2.msra.mxu0 0.0
    %207 = vmatprep.subr.mxu0 0.0
    %208 = vmatpush2.msra.mxu0 0.0
    %209 = vmatprep.subr.mxu0 0.0
    %210 = vmatpush2.msra.mxu0 0.0
    %211 = vmatprep.mubr.f32.mxu0 0.0
    %212 = vmatmul.mubr.f32.gmra.mxu0 %v123
    %v213 = vpop.f32.mrf.mxu0
    %v214 = vadd.f32 %v145, %v213
    %v215 = vpop.f32.mrf.mxu0
    %216 = vdwg.mxu0
    %vm217 = vcmask 23552
    %218 = vst.msk [vmem:[%s5] sm:$0xff] %vm217, %v214
    %v219 = vlaneseq
    %v220 = vand.u32 %v219, 127
    %vm221 = vcmp.lt.s32.totalorder %v220, 3
    %v222 = vsel %vm221, %v214, -inf
    %223 = vmax.xlane.f32.xlu0 %v222
    %v224 = vpop.xlane.xlu0 %223
    %vm225 = vcmp.eq.f32.partialorder %v222, %v224
    %v226 = vsel %vm225, %v220, 128
    %v227 = vand.u32 %v226, 65535
    %v228 = vshra.s32 %v226, 16
    %v229 = vcvt.s32.f32 %v227
    %v230 = vcvt.s32.f32 %v228
    %231 = vmin.xlane.f32.xlu0 %v230
    %v232 = vpop.xlane.xlu0 %231
    %vm233 = vcmp.eq.f32.partialorder %v230, %v232
    %v234 = vsel %vm233, %v229, inf
    %235 = vmin.xlane.f32.xlu0 %v234
    %v236 = vpop.xlane.xlu0 %235
    %v237 = vcvt.f32.s32 %v236
    %v238 = vcvt.f32.s32 %v232
    %v239 = vshll.u32 %v238, 16
    %v240 = vadd.s32 %v239, %v237
    %vm241 = vcmask 7168
    %242 = vst.msk [vmem:[%s6] sm:$0xff] %vm241, %v240
    // Predicated region
    $region26: #{tpu_custom_call.1} parent=1 // pred_check
      _
    $region27: #{tpu_custom_call.1} parent=1 // pred_check_branch
      %244 = sbr.rel (0) target = $region29
    $region28: #{tpu_custom_call.1} parent=1 // pred_region
      _
    $region29: #{tpu_custom_call.1} parent=1 // pred_fallthru
      _
    // Predicated region
    $region30: #{tpu_custom_call.1} parent=1 // pred_check
      _
    $region31: #{tpu_custom_call.1} parent=1 // pred_check_branch
      %246 = sbr.rel (0) target = $region33
    $region32: #{tpu_custom_call.1} parent=1 // pred_region
      _
    $region33: #{tpu_custom_call.1} parent=1 // pred_fallthru
      _
    // Predicated region
    $region34: #{tpu_custom_call.1} parent=1 // pred_check
      _
    $region35: #{tpu_custom_call.1} parent=1 // pred_check_branch
      %248 = sbr.rel (0) target = $region37
    $region36: #{tpu_custom_call.1} parent=1 // pred_region
      _
    $region37: #{tpu_custom_call.1} parent=1 // pred_fallthru
      _
    // Predicated region
    $region38: #{tpu_custom_call.1} parent=1 // pred_check
      _
    $region39: #{tpu_custom_call.1} parent=1 // pred_check_branch
      %250 = sbr.rel (0) target = $region41
    $region40: #{tpu_custom_call.1} parent=1 // pred_region
      _
    $region41: #{tpu_custom_call.1} parent=1 // pred_fallthru
      _
    %251 = vsyncpa [#allocation3], 1

</llo_original>
